<compile_context>
chip_gen: v7x
topology: tpu7x:2x2x1
jax: 0.10.0
libtpu: 0.0.40
codegen_flags: <defaults>
</compile_context>

<pallas_src>
import functools

import jax
import jax.numpy as jnp
from jax.experimental import pallas as pl
from jax.experimental.pallas import tpu as pltpu

LANE = 128
_VMEM = pl.BlockSpec(memory_space=pltpu.MemorySpace.VMEM)


def _round_up(x, m):
    return -(-x // m) * m


# ---------------------------------------------------------------------------
# Single fused Pallas kernel: all GIN layers + merged pos/neg edge predictor
# ---------------------------------------------------------------------------
def _gin_fused_kernel(*refs, num_layers, num_adj, adj_map):
    f32, bf16 = jnp.float32, jnp.bfloat16

    pos = 0
    x_ref = refs[pos]; pos += 1
    adj_refs = refs[pos:pos + num_adj]; pos += num_adj
    w1_refs = refs[pos:pos + num_layers]; pos += num_layers
    w2_refs = refs[pos:pos + num_layers]; pos += num_layers
    idx_ref = refs[pos]; pos += 1
    pw1_ref, pb1_ref, pw2_ref, pb2_ref, pw3_ref, pb3_ref = refs[pos:pos + 6]
    pos += 6
    out_ref = refs[pos]

    # ---- GIN layers (unrolled; h stays VMEM/vreg resident in f32) ----
    h = x_ref[...].astype(f32)                                     # [N, in]
    for l in range(num_layers):
        hb = h.astype(bf16)                                        # cast once/layer
        # sum-aggregate neighbors + (1+eps)*self, eps = 0 (f32 residual path)
        agg = jnp.dot(adj_refs[adj_map[l]][...], hb,
                      preferred_element_type=f32) + h
        # two-layer MLP (bias=False) with ReLU in between
        z = jnp.maximum(jnp.dot(agg.astype(bf16), w1_refs[l][...],
                                preferred_element_type=f32), 0.0)
        h = jnp.dot(z.astype(bf16), w2_refs[l][...],
                    preferred_element_type=f32)
        if l != num_layers - 1:                                    # inter-layer ReLU
            h = jnp.maximum(h, 0.0)

    # ---- edge-endpoint gather: in-kernel one-hot (iota compare) + ONE matmul ----
    hb = h.astype(bf16)                                            # [N, hid]
    ids = idx_ref[...]                                             # [2*Ep, 1] int32
    two_e = ids.shape[0]
    n_nodes = hb.shape[0]
    sel = (ids == jax.lax.broadcasted_iota(jnp.int32, (two_e, n_nodes), 1)
           ).astype(bf16)                                          # [2*Ep, N]
    g = jnp.dot(sel, hb, preferred_element_type=f32)               # [2*Ep, hid]
    ep = two_e // 2
    e = (g[:ep] * g[ep:]).astype(bf16)                             # [Ep, hid]

    # ---- predictor MLP (biases broadcast over rows); lane-dense output ----
    z1 = jnp.maximum(jnp.dot(e, pw1_ref[...], preferred_element_type=f32)
                     + pb1_ref[...], 0.0)
    z2 = jnp.maximum(jnp.dot(z1.astype(bf16), pw2_ref[...],
                             preferred_element_type=f32) + pb2_ref[...], 0.0)
    out_ref[...] = (jnp.dot(z2.astype(bf16), pw3_ref[...],
                            preferred_element_type=f32) + pb3_ref[...])


# ---------------------------------------------------------------------------
# One-time parameter packing (hoisted out of the per-call path)
# ---------------------------------------------------------------------------
def pack_gin_params(adjs, gin_weights, pred_params):
    """Pack/cast everything once at model-init time.

    adjs:        list of [N, N] f32 adjacencies (one per layer; duplicates by
                 identity are DMA'd only once).
    gin_weights: list of (w1[in,out], w2[in,out]) per layer (no bias).
    pred_params: (w1[in,out], b1, w2[in,out], b2, w3[in,1], b3).
    """
    bf16, f32 = jnp.bfloat16, jnp.float32

    # de-duplicate adjacencies (same block used by every layer in full-neighbor
    # sampling) -> single DMA, static per-layer index map baked into the kernel
    uniq, adj_map = [], []
    for a in adjs:
        for j, u in enumerate(uniq):
            if a is u:
                adj_map.append(j)
                break
        else:
            adj_map.append(len(uniq))
            uniq.append(a)
    adjs_p = tuple(jnp.asarray(a, bf16) for a in uniq)             # exact for 0/1

    w1s = tuple(jnp.asarray(w1, bf16) for w1, _ in gin_weights)    # real shapes
    w2s = tuple(jnp.asarray(w2, bf16) for _, w2 in gin_weights)

    pw1, pb1, pw2, pb2, pw3, pb3 = pred_params
    hid = pw1.shape[0]
    pw1_p = jnp.asarray(pw1, bf16)
    pw2_p = jnp.asarray(pw2, bf16)
    pb1_p = jnp.asarray(pb1, f32).reshape(1, hid)
    pb2_p = jnp.asarray(pb2, f32).reshape(1, hid)
    # final 1-wide projection padded to a lane-dense 128-wide output (col 0 real)
    pw3_p = jnp.zeros((hid, LANE), bf16).at[:, :1].set(jnp.asarray(pw3, bf16))
    pb3_p = jnp.zeros((1, LANE), f32).at[:, :1].set(
        jnp.asarray(pb3, f32).reshape(1, 1))

    arrays = (adjs_p, w1s, w2s, (pw1_p, pb1_p, pw2_p, pb2_p, pw3_p, pb3_p))
    meta = (len(gin_weights), len(uniq), tuple(adj_map))
    return arrays, meta


# ---------------------------------------------------------------------------
# Per-call forward: minimal glue + single pallas_call
# ---------------------------------------------------------------------------
@functools.partial(jax.jit, static_argnums=(1,))
def gin_forward(arrays, meta, x, pos_src, pos_dst, neg_src, neg_dst):
    num_layers, num_adj, adj_map = meta
    adjs_p, w1s, w2s, pred_p = arrays

    # merged pos+neg edge batch as a tiny [2*Ep, 1] int32 index column.
    # fill = -1 never matches the iota -> all-zero gathered rows -> bias-only
    # garbage at padded rows, sliced off below.
    n_pos, n_neg = pos_src.shape[0], neg_src.shape[0]
    e_tot = n_pos + n_neg
    ep = _round_up(max(e_tot, 8), 8)
    fill = -jnp.ones((ep - e_tot,), jnp.int32)
    src = jnp.concatenate([pos_src.astype(jnp.int32),
                           neg_src.astype(jnp.int32), fill])
    dst = jnp.concatenate([pos_dst.astype(jnp.int32),
                           neg_dst.astype(jnp.int32), fill])
    idx = jnp.concatenate([src, dst])[:, None]                     # [2*Ep, 1]

    kernel = functools.partial(_gin_fused_kernel, num_layers=num_layers,
                               num_adj=num_adj, adj_map=adj_map)
    n_in = 1 + num_adj + 2 * num_layers + 1 + 6
    out = pl.pallas_call(
        kernel,
        out_shape=jax.ShapeDtypeStruct((ep, LANE), jnp.float32),
        in_specs=[_VMEM] * n_in,
        out_specs=_VMEM,
    )(x.astype(jnp.bfloat16), *adjs_p, *w1s, *w2s, idx, *pred_p)

    scores = out[:e_tot, 0:1]
    return scores[:n_pos], scores[n_pos:]


# ---------------------------------------------------------------------------
# Pure-JAX f32 reference (for correctness checking only)
# ---------------------------------------------------------------------------
def gin_reference(x, adjs, gin_weights, pred_params,
                  pos_src, pos_dst, neg_src, neg_dst):
    h = x
    num_layers = len(gin_weights)
    for l, (adj, (w1, w2)) in enumerate(zip(adjs, gin_weights)):
        agg = adj @ h + h
        h = jnp.maximum(agg @ w1, 0.0) @ w2
        if l != num_layers - 1:
            h = jnp.maximum(h, 0.0)
    w1, b1, w2, b2, w3, b3 = pred_params

    def pred(e):
        z1 = jnp.maximum(e @ w1 + b1, 0.0)
        z2 = jnp.maximum(z1 @ w2 + b2, 0.0)
        return z2 @ w3 + b3

    return pred(h[pos_src] * h[pos_dst]), pred(h[neg_src] * h[neg_dst])


# ---------------------------------------------------------------------------
# Deterministic parameter / input construction + run
# ---------------------------------------------------------------------------
if __name__ == "__main__":
    N, IN_SIZE, HID, NUM_LAYERS = 16, 16, 32, 3
    E_POS, E_NEG = 8, 8

    key = jax.random.PRNGKey(0)
    keys = iter(jax.random.split(key, 32))

    # node features
    x = jax.random.normal(next(keys), (N, IN_SIZE), dtype=jnp.float32)

    # same dense "block" adjacency for every layer (full-neighbor sampling)
    adj = (jax.random.uniform(next(keys), (N, N)) < 0.3).astype(jnp.float32)
    adjs = [adj] * NUM_LAYERS

    # GIN layer MLP weights.  PyTorch Linear stores W as [out, in]; kernels
    # consume [in, out], so transpose here (one-time glue).
    dims = [IN_SIZE] + [HID] * NUM_LAYERS
    gin_weights = []
    for l in range(NUM_LAYERS):
        w1 = 0.1 * jax.random.normal(next(keys), (HID, dims[l]), dtype=jnp.float32)
        w2 = 0.1 * jax.random.normal(next(keys), (HID, HID), dtype=jnp.float32)
        gin_weights.append((w1.T, w2.T))

    # predictor: Linear(HID,HID)+b -> ReLU -> Linear(HID,HID)+b -> ReLU -> Linear(HID,1)+b
    pw1 = 0.1 * jax.random.normal(next(keys), (HID, HID), dtype=jnp.float32)
    pb1 = 0.1 * jax.random.normal(next(keys), (HID,), dtype=jnp.float32)
    pw2 = 0.1 * jax.random.normal(next(keys), (HID, HID), dtype=jnp.float32)
    pb2 = 0.1 * jax.random.normal(next(keys), (HID,), dtype=jnp.float32)
    pw3 = 0.1 * jax.random.normal(next(keys), (1, HID), dtype=jnp.float32)
    pb3 = 0.1 * jax.random.normal(next(keys), (1,), dtype=jnp.float32)
    pred_params = (pw1.T, pb1, pw2.T, pb2, pw3.T, pb3)

    # pos / neg edge index sets (pair_graph.edges(), neg_pair_graph.edges())
    pos_src = jax.random.randint(next(keys), (E_POS,), 0, N)
    pos_dst = jax.random.randint(next(keys), (E_POS,), 0, N)
    neg_src = jax.random.randint(next(keys), (E_NEG,), 0, N)
    neg_dst = jax.random.randint(next(keys), (E_NEG,), 0, N)

    # one-time packing (hoisted out of the per-call path)
    arrays, meta = pack_gin_params(adjs, gin_weights, pred_params)

    h_pos, h_neg = gin_forward(arrays, meta, x,
                               pos_src, pos_dst, neg_src, neg_dst)
    jax.block_until_ready((h_pos, h_neg))
    assert h_pos.shape == (E_POS, 1) and h_neg.shape == (E_NEG, 1)

    # correctness vs. pure-f32 reference (bf16 compute -> loose tolerance)
    r_pos, r_neg = gin_reference(x, adjs, gin_weights, pred_params,
                                 pos_src, pos_dst, neg_src, neg_dst)
    err = max(float(jnp.max(jnp.abs(h_pos - r_pos))),
              float(jnp.max(jnp.abs(h_neg - r_neg))))
    assert err < 5e-2, f"mismatch vs f32 reference: {err}"
    print("KERNEL_OK")
</pallas_src>

<mosaic_0001>
module attributes {stable_mosaic.version = 11 : i64} {
  func.func @_gin_fused_kernel(%arg0: memref<16x16xbf16, #tpu.memory_space<vmem>>, %arg1: memref<16x16xbf16, #tpu.memory_space<vmem>>, %arg2: memref<16x32xbf16, #tpu.memory_space<vmem>>, %arg3: memref<32x32xbf16, #tpu.memory_space<vmem>>, %arg4: memref<32x32xbf16, #tpu.memory_space<vmem>>, %arg5: memref<32x32xbf16, #tpu.memory_space<vmem>>, %arg6: memref<32x32xbf16, #tpu.memory_space<vmem>>, %arg7: memref<32x32xbf16, #tpu.memory_space<vmem>>, %arg8: memref<32x1xi32, #tpu.memory_space<vmem>>, %arg9: memref<32x32xbf16, #tpu.memory_space<vmem>>, %arg10: memref<1x32xf32, #tpu.memory_space<vmem>>, %arg11: memref<32x32xbf16, #tpu.memory_space<vmem>>, %arg12: memref<1x32xf32, #tpu.memory_space<vmem>>, %arg13: memref<32x128xbf16, #tpu.memory_space<vmem>>, %arg14: memref<1x128xf32, #tpu.memory_space<vmem>>, %arg15: memref<16x128xf32, #tpu.memory_space<vmem>>) attributes {dimension_semantics = [], scalar_prefetch = 0 : i64, scratch_operands = 0 : i64, tpu.core_type = #tpu.core_type<tc>} {
    %c0 = arith.constant 0 : index
    %c0_0 = arith.constant 0 : index
    %0 = vector.load %arg0[%c0, %c0_0] : memref<16x16xbf16, #tpu.memory_space<vmem>>, vector<16x16xbf16>
    %1 = arith.extf %0 : vector<16x16xbf16> to vector<16x16xf32>
    %2 = arith.truncf %1 : vector<16x16xf32> to vector<16x16xbf16>
    %c0_1 = arith.constant 0 : index
    %c0_2 = arith.constant 0 : index
    %3 = vector.load %arg1[%c0_1, %c0_2] : memref<16x16xbf16, #tpu.memory_space<vmem>>, vector<16x16xbf16>
    %cst = arith.constant dense<0.000000e+00> : vector<16x16xf32>
    %4 = tpu.matmul %3, %2, %cst {dimension_numbers = #tpu.dot_dimension_numbers<[1], [0], [0], [1], [0, 0, 1, 1], [], []>} : vector<16x16xbf16>, vector<16x16xbf16>, vector<16x16xf32> -> vector<16x16xf32>
    %5 = arith.addf %4, %1 : vector<16x16xf32>
    %6 = arith.truncf %5 : vector<16x16xf32> to vector<16x16xbf16>
    %c0_3 = arith.constant 0 : index
    %c0_4 = arith.constant 0 : index
    %7 = vector.load %arg2[%c0_3, %c0_4] : memref<16x32xbf16, #tpu.memory_space<vmem>>, vector<16x32xbf16>
    %cst_5 = arith.constant dense<0.000000e+00> : vector<16x32xf32>
    %8 = tpu.matmul %6, %7, %cst_5 {dimension_numbers = #tpu.dot_dimension_numbers<[1], [0], [0], [1], [0, 0, 1, 1], [], []>} : vector<16x16xbf16>, vector<16x32xbf16>, vector<16x32xf32> -> vector<16x32xf32>
    %cst_6 = arith.constant 0.000000e+00 : f32
    %9 = vector.broadcast %cst_6 : f32 to vector<16x32xf32>
    %10 = arith.maximumf %8, %9 : vector<16x32xf32>
    %11 = arith.truncf %10 : vector<16x32xf32> to vector<16x32xbf16>
    %c0_7 = arith.constant 0 : index
    %c0_8 = arith.constant 0 : index
    %12 = vector.load %arg5[%c0_7, %c0_8] : memref<32x32xbf16, #tpu.memory_space<vmem>>, vector<32x32xbf16>
    %cst_9 = arith.constant dense<0.000000e+00> : vector<16x32xf32>
    %13 = tpu.matmul %11, %12, %cst_9 {dimension_numbers = #tpu.dot_dimension_numbers<[1], [0], [0], [1], [0, 0, 1, 1], [], []>} : vector<16x32xbf16>, vector<32x32xbf16>, vector<16x32xf32> -> vector<16x32xf32>
    %cst_10 = arith.constant 0.000000e+00 : f32
    %14 = vector.broadcast %cst_10 : f32 to vector<16x32xf32>
    %15 = arith.maximumf %13, %14 : vector<16x32xf32>
    %16 = arith.truncf %15 : vector<16x32xf32> to vector<16x32xbf16>
    %c0_11 = arith.constant 0 : index
    %c0_12 = arith.constant 0 : index
    %17 = vector.load %arg1[%c0_11, %c0_12] : memref<16x16xbf16, #tpu.memory_space<vmem>>, vector<16x16xbf16>
    %cst_13 = arith.constant dense<0.000000e+00> : vector<16x32xf32>
    %18 = tpu.matmul %17, %16, %cst_13 {dimension_numbers = #tpu.dot_dimension_numbers<[1], [0], [0], [1], [0, 0, 1, 1], [], []>} : vector<16x16xbf16>, vector<16x32xbf16>, vector<16x32xf32> -> vector<16x32xf32>
    %19 = arith.addf %18, %15 : vector<16x32xf32>
    %20 = arith.truncf %19 : vector<16x32xf32> to vector<16x32xbf16>
    %c0_14 = arith.constant 0 : index
    %c0_15 = arith.constant 0 : index
    %21 = vector.load %arg3[%c0_14, %c0_15] : memref<32x32xbf16, #tpu.memory_space<vmem>>, vector<32x32xbf16>
    %cst_16 = arith.constant dense<0.000000e+00> : vector<16x32xf32>
    %22 = tpu.matmul %20, %21, %cst_16 {dimension_numbers = #tpu.dot_dimension_numbers<[1], [0], [0], [1], [0, 0, 1, 1], [], []>} : vector<16x32xbf16>, vector<32x32xbf16>, vector<16x32xf32> -> vector<16x32xf32>
    %cst_17 = arith.constant 0.000000e+00 : f32
    %23 = vector.broadcast %cst_17 : f32 to vector<16x32xf32>
    %24 = arith.maximumf %22, %23 : vector<16x32xf32>
    %25 = arith.truncf %24 : vector<16x32xf32> to vector<16x32xbf16>
    %c0_18 = arith.constant 0 : index
    %c0_19 = arith.constant 0 : index
    %26 = vector.load %arg6[%c0_18, %c0_19] : memref<32x32xbf16, #tpu.memory_space<vmem>>, vector<32x32xbf16>
    %cst_20 = arith.constant dense<0.000000e+00> : vector<16x32xf32>
    %27 = tpu.matmul %25, %26, %cst_20 {dimension_numbers = #tpu.dot_dimension_numbers<[1], [0], [0], [1], [0, 0, 1, 1], [], []>} : vector<16x32xbf16>, vector<32x32xbf16>, vector<16x32xf32> -> vector<16x32xf32>
    %cst_21 = arith.constant 0.000000e+00 : f32
    %28 = vector.broadcast %cst_21 : f32 to vector<16x32xf32>
    %29 = arith.maximumf %27, %28 : vector<16x32xf32>
    %30 = arith.truncf %29 : vector<16x32xf32> to vector<16x32xbf16>
    %c0_22 = arith.constant 0 : index
    %c0_23 = arith.constant 0 : index
    %31 = vector.load %arg1[%c0_22, %c0_23] : memref<16x16xbf16, #tpu.memory_space<vmem>>, vector<16x16xbf16>
    %cst_24 = arith.constant dense<0.000000e+00> : vector<16x32xf32>
    %32 = tpu.matmul %31, %30, %cst_24 {dimension_numbers = #tpu.dot_dimension_numbers<[1], [0], [0], [1], [0, 0, 1, 1], [], []>} : vector<16x16xbf16>, vector<16x32xbf16>, vector<16x32xf32> -> vector<16x32xf32>
    %33 = arith.addf %32, %29 : vector<16x32xf32>
    %34 = arith.truncf %33 : vector<16x32xf32> to vector<16x32xbf16>
    %c0_25 = arith.constant 0 : index
    %c0_26 = arith.constant 0 : index
    %35 = vector.load %arg4[%c0_25, %c0_26] : memref<32x32xbf16, #tpu.memory_space<vmem>>, vector<32x32xbf16>
    %cst_27 = arith.constant dense<0.000000e+00> : vector<16x32xf32>
    %36 = tpu.matmul %34, %35, %cst_27 {dimension_numbers = #tpu.dot_dimension_numbers<[1], [0], [0], [1], [0, 0, 1, 1], [], []>} : vector<16x32xbf16>, vector<32x32xbf16>, vector<16x32xf32> -> vector<16x32xf32>
    %cst_28 = arith.constant 0.000000e+00 : f32
    %37 = vector.broadcast %cst_28 : f32 to vector<16x32xf32>
    %38 = arith.maximumf %36, %37 : vector<16x32xf32>
    %39 = arith.truncf %38 : vector<16x32xf32> to vector<16x32xbf16>
    %c0_29 = arith.constant 0 : index
    %c0_30 = arith.constant 0 : index
    %40 = vector.load %arg7[%c0_29, %c0_30] : memref<32x32xbf16, #tpu.memory_space<vmem>>, vector<32x32xbf16>
    %cst_31 = arith.constant dense<0.000000e+00> : vector<16x32xf32>
    %41 = tpu.matmul %39, %40, %cst_31 {dimension_numbers = #tpu.dot_dimension_numbers<[1], [0], [0], [1], [0, 0, 1, 1], [], []>} : vector<16x32xbf16>, vector<32x32xbf16>, vector<16x32xf32> -> vector<16x32xf32>
    %42 = arith.truncf %41 : vector<16x32xf32> to vector<16x32xbf16>
    %c0_32 = arith.constant 0 : index
    %c0_33 = arith.constant 0 : index
    %43 = vector.load %arg8[%c0_32, %c0_33] : memref<32x1xi32, #tpu.memory_space<vmem>>, vector<32x1xi32>
    %44 = tpu.iota {dimensions = array<i32: 1>} : vector<32x16xi32>
    %45 = vector.broadcast %43 : vector<32x1xi32> to vector<32x16xi32>
    %46 = arith.cmpi eq, %45, %44 : vector<32x16xi32>
    %47 = arith.extui %46 : vector<32x16xi1> to vector<32x16xi32>
    %48 = arith.sitofp %47 : vector<32x16xi32> to vector<32x16xf32>
    %49 = arith.truncf %48 : vector<32x16xf32> to vector<32x16xbf16>
    %cst_34 = arith.constant dense<0.000000e+00> : vector<32x32xf32>
    %50 = tpu.matmul %49, %42, %cst_34 {dimension_numbers = #tpu.dot_dimension_numbers<[1], [0], [0], [1], [0, 0, 1, 1], [], []>} : vector<32x16xbf16>, vector<16x32xbf16>, vector<32x32xf32> -> vector<32x32xf32>
    %51 = vector.extract_strided_slice %50 {offsets = [0, 0], sizes = [16, 32], strides = [1, 1]} : vector<32x32xf32> to vector<16x32xf32>
    %52 = vector.extract_strided_slice %50 {offsets = [16, 0], sizes = [16, 32], strides = [1, 1]} : vector<32x32xf32> to vector<16x32xf32>
    %53 = arith.mulf %51, %52 : vector<16x32xf32>
    %54 = arith.truncf %53 : vector<16x32xf32> to vector<16x32xbf16>
    %c0_35 = arith.constant 0 : index
    %c0_36 = arith.constant 0 : index
    %55 = vector.load %arg9[%c0_35, %c0_36] : memref<32x32xbf16, #tpu.memory_space<vmem>>, vector<32x32xbf16>
    %cst_37 = arith.constant dense<0.000000e+00> : vector<16x32xf32>
    %56 = tpu.matmul %54, %55, %cst_37 {dimension_numbers = #tpu.dot_dimension_numbers<[1], [0], [0], [1], [0, 0, 1, 1], [], []>} : vector<16x32xbf16>, vector<32x32xbf16>, vector<16x32xf32> -> vector<16x32xf32>
    %c0_38 = arith.constant 0 : index
    %c0_39 = arith.constant 0 : index
    %57 = vector.load %arg10[%c0_38, %c0_39] : memref<1x32xf32, #tpu.memory_space<vmem>>, vector<1x32xf32>
    %58 = vector.broadcast %57 : vector<1x32xf32> to vector<16x32xf32>
    %59 = arith.addf %56, %58 : vector<16x32xf32>
    %cst_40 = arith.constant 0.000000e+00 : f32
    %60 = vector.broadcast %cst_40 : f32 to vector<16x32xf32>
    %61 = arith.maximumf %59, %60 : vector<16x32xf32>
    %62 = arith.truncf %61 : vector<16x32xf32> to vector<16x32xbf16>
    %c0_41 = arith.constant 0 : index
    %c0_42 = arith.constant 0 : index
    %63 = vector.load %arg11[%c0_41, %c0_42] : memref<32x32xbf16, #tpu.memory_space<vmem>>, vector<32x32xbf16>
    %cst_43 = arith.constant dense<0.000000e+00> : vector<16x32xf32>
    %64 = tpu.matmul %62, %63, %cst_43 {dimension_numbers = #tpu.dot_dimension_numbers<[1], [0], [0], [1], [0, 0, 1, 1], [], []>} : vector<16x32xbf16>, vector<32x32xbf16>, vector<16x32xf32> -> vector<16x32xf32>
    %c0_44 = arith.constant 0 : index
    %c0_45 = arith.constant 0 : index
    %65 = vector.load %arg12[%c0_44, %c0_45] : memref<1x32xf32, #tpu.memory_space<vmem>>, vector<1x32xf32>
    %66 = vector.broadcast %65 : vector<1x32xf32> to vector<16x32xf32>
    %67 = arith.addf %64, %66 : vector<16x32xf32>
    %cst_46 = arith.constant 0.000000e+00 : f32
    %68 = vector.broadcast %cst_46 : f32 to vector<16x32xf32>
    %69 = arith.maximumf %67, %68 : vector<16x32xf32>
    %70 = arith.truncf %69 : vector<16x32xf32> to vector<16x32xbf16>
    %c0_47 = arith.constant 0 : index
    %c0_48 = arith.constant 0 : index
    %71 = vector.load %arg13[%c0_47, %c0_48] : memref<32x128xbf16, #tpu.memory_space<vmem>>, vector<32x128xbf16>
    %cst_49 = arith.constant dense<0.000000e+00> : vector<16x128xf32>
    %72 = tpu.matmul %70, %71, %cst_49 {dimension_numbers = #tpu.dot_dimension_numbers<[1], [0], [0], [1], [0, 0, 1, 1], [], []>} : vector<16x32xbf16>, vector<32x128xbf16>, vector<16x128xf32> -> vector<16x128xf32>
    %c0_50 = arith.constant 0 : index
    %c0_51 = arith.constant 0 : index
    %73 = vector.load %arg14[%c0_50, %c0_51] : memref<1x128xf32, #tpu.memory_space<vmem>>, vector<1x128xf32>
    %74 = vector.broadcast %73 : vector<1x128xf32> to vector<16x128xf32>
    %75 = arith.addf %72, %74 : vector<16x128xf32>
    %c0_52 = arith.constant 0 : index
    %c0_53 = arith.constant 0 : index
    %76 = vector.load %arg15[%c0_52, %c0_53] : memref<16x128xf32, #tpu.memory_space<vmem>>, vector<16x128xf32>
    tpu.vector_store %arg15[%c0_52, %c0_53], %75 {strides = array<i32>} : memref<16x128xf32, #tpu.memory_space<vmem>>, vector<16x128xf32>,
    return
  }
}

</mosaic_0001>

<llo_original>
// kernel: gin_forward.1
$region0: #{gin_forward.1}
  #allocation0 [shape = 'u32[]', space=smem, size = 0x4, offset = 0x4, fixed_abs, tag = 'smem constant byte address 0x4 - core index']
  #allocation1 [shape = 'u32[144,128]{1,0:T(1,128)}', space=vmem, size = 0x12000, scoped, tag = 'internal scratch']
  %s0 = inlined_call_operand.vmem [shape: bf16[16,16], index: 0, kind: input, shape index: {}]
  %s1 = inlined_call_operand.hbm [shape: bf16[16,16], index: 1, kind: input, shape index: {}]
  %s2 = inlined_call_operand.hbm [shape: bf16[16,32], index: 2, kind: input, shape index: {}]
  %s3 = inlined_call_operand.vmem [shape: bf16[32,32], index: 3, kind: input, shape index: {}]
  %s4 = inlined_call_operand.vmem [shape: bf16[32,32], index: 4, kind: input, shape index: {}]
  %s5 = inlined_call_operand.vmem [shape: bf16[32,32], index: 5, kind: input, shape index: {}]
  %s6 = inlined_call_operand.vmem [shape: bf16[32,32], index: 6, kind: input, shape index: {}]
  %s7 = inlined_call_operand.vmem [shape: bf16[32,32], index: 7, kind: input, shape index: {}]
  %s8 = inlined_call_operand.vmem [shape: s32[32,1], index: 8, kind: input, shape index: {}]
  %s9 = inlined_call_operand.hbm [shape: bf16[32,32], index: 9, kind: input, shape index: {}]
  %s10 = inlined_call_operand.hbm [shape: f32[1,32], index: 10, kind: input, shape index: {}]
  %s11 = inlined_call_operand.vmem [shape: bf16[32,32], index: 11, kind: input, shape index: {}]
  %s12 = inlined_call_operand.vmem [shape: f32[1,32], index: 12, kind: input, shape index: {}]
  %s13 = inlined_call_operand.hbm [shape: bf16[32,128], index: 13, kind: input, shape index: {}]
  %s14 = inlined_call_operand.vmem [shape: f32[1,128], index: 14, kind: input, shape index: {}]
  %s15 = inlined_call_operand.vmem [shape: f32[16,128], index: 15, kind: output, shape index: {}]
  %s16 = sld [smem:[#allocation0]]
  $region90: #{gin_forward.1} parent=0
    _
  %s18 = ssub.s32 1, %s16
  %s19 = scalar_select 0, %s18, %s16
  $region1: #{gin_forward.1} parent=0
    #allocation2 [shape = 'u8[4096]{0}', space=vmem, size = 0x1000, scoped, tag = 'input window, operand 1, single buffered']
    #allocation3 [shape = 's32[1]{0}', space=sflag, size = 0x4, scoped, tag = 'scoped memory for gin_forward.1']
    #allocation4 [shape = 'u8[4096]{0}', space=vmem, size = 0x1000, scoped, tag = 'input window, operand 2, single buffered']
    #allocation5 [shape = 's32[1]{0}', space=sflag, size = 0x4, scoped, tag = 'scoped memory for gin_forward.1']
    #allocation6 [shape = 'u8[8192]{0}', space=vmem, size = 0x2000, scoped, tag = 'input window, operand 9, single buffered']
    #allocation7 [shape = 'u8[512]{0}', space=vmem, size = 0x400, scoped, tag = 'input window, operand 10, single buffered']
    #allocation8 [shape = 's32[1]{0}', space=sflag, size = 0x4, scoped, tag = 'scoped memory for gin_forward.1']
    #allocation9 [shape = 'u8[8192]{0}', space=vmem, size = 0x2000, scoped, tag = 'input window, operand 13, single buffered']
    %20 = vsyncpa [#allocation3], 0
    %21 = vsyncpa [#allocation5], 0
    %22 = vsyncpa [#allocation8], 0
    // Predicated region
    $region2: #{gin_forward.1} parent=1 // pred_check
      _
    $region3: #{gin_forward.1} parent=1 // pred_check_branch
      %24 = sbr.rel (0) target = $region5
    $region4: #{gin_forward.1} parent=1 // pred_region
      _
    $region5: #{gin_forward.1} parent=1 // pred_fallthru
      _
    // Predicated region
    $region6: #{gin_forward.1} parent=1 // pred_check
      _
    $region7: #{gin_forward.1} parent=1 // pred_check_branch
      %26 = sbr.rel (0) target = $region9
    $region8: #{gin_forward.1} parent=1 // pred_region
      %s28 = ssub.s32 128, 128
      %29 = vsyncadd [#allocation3], %s28
      %s30 = sshll.u32 [#allocation2], 4
      %s31 = int_to_ptr.vmem [resolvable:$true] %s30
      %36 = dma.hbm_to_vmem [thread:$0]  %s1, 128, %s31, [#allocation3], 64, 64, 4
    $region9: #{gin_forward.1} parent=1 // pred_fallthru
      _
    // Predicated region
    $region10: #{gin_forward.1} parent=1 // pred_check
      _
    $region11: #{gin_forward.1} parent=1 // pred_check_branch
      %38 = sbr.rel (0) target = $region13
    $region12: #{gin_forward.1} parent=1 // pred_region
      %s40 = ssub.s32 128, 128
      %41 = vsyncadd [#allocation5], %s40
      %s42 = sshll.u32 [#allocation4], 4
      %s43 = int_to_ptr.vmem [resolvable:$true] %s42
      %48 = dma.hbm_to_vmem [thread:$0]  %s2, 128, %s43, [#allocation5], 64, 64, 4
    $region13: #{gin_forward.1} parent=1 // pred_fallthru
      _
    // Predicated region
    $region14: #{gin_forward.1} parent=1 // pred_check
      _
    $region15: #{gin_forward.1} parent=1 // pred_check_branch
      %50 = sbr.rel (0) target = $region17
    $region16: #{gin_forward.1} parent=1 // pred_region
      _
    $region17: #{gin_forward.1} parent=1 // pred_fallthru
      _
    // Predicated region
    $region18: #{gin_forward.1} parent=1 // pred_check
      _
    $region19: #{gin_forward.1} parent=1 // pred_check_branch
      %52 = sbr.rel (0) target = $region21
    $region20: #{gin_forward.1} parent=1 // pred_region
      _
    $region21: #{gin_forward.1} parent=1 // pred_fallthru
      _
    // Predicated region
    $region22: #{gin_forward.1} parent=1 // pred_check
      _
    $region23: #{gin_forward.1} parent=1 // pred_check_branch
      %54 = sbr.rel (0) target = $region25
    $region24: #{gin_forward.1} parent=1 // pred_region
      _
    $region25: #{gin_forward.1} parent=1 // pred_fallthru
      _
    // Predicated region
    $region26: #{gin_forward.1} parent=1 // pred_check
      _
    $region27: #{gin_forward.1} parent=1 // pred_check_branch
      %56 = sbr.rel (0) target = $region29
    $region28: #{gin_forward.1} parent=1 // pred_region
      _
    $region29: #{gin_forward.1} parent=1 // pred_fallthru
      _
    // Predicated region
    $region30: #{gin_forward.1} parent=1 // pred_check
      _
    $region31: #{gin_forward.1} parent=1 // pred_check_branch
      %58 = sbr.rel (0) target = $region33
    $region32: #{gin_forward.1} parent=1 // pred_region
      _
    $region33: #{gin_forward.1} parent=1 // pred_fallthru
      _
    // Predicated region
    $region34: #{gin_forward.1} parent=1 // pred_check
      _
    $region35: #{gin_forward.1} parent=1 // pred_check_branch
      %60 = sbr.rel (0) target = $region37
    $region36: #{gin_forward.1} parent=1 // pred_region
      _
    $region37: #{gin_forward.1} parent=1 // pred_fallthru
      _
    // Predicated region
    $region38: #{gin_forward.1} parent=1 // pred_check
      _
    $region39: #{gin_forward.1} parent=1 // pred_check_branch
      %62 = sbr.rel (0) target = $region41
    $region40: #{gin_forward.1} parent=1 // pred_region
      %s64 = ssub.s32 256, 256
      %65 = vsyncadd [#allocation5], %s64
      %s66 = sshll.u32 [#allocation6], 4
      %s67 = int_to_ptr.vmem [resolvable:$true] %s66
      %72 = dma.hbm_to_vmem [thread:$0]  %s9, 256, %s67, [#allocation5], 64, 64, 4
    $region41: #{gin_forward.1} parent=1 // pred_fallthru
      _
    // Predicated region
    $region42: #{gin_forward.1} parent=1 // pred_check
      _
    $region43: #{gin_forward.1} parent=1 // pred_check_branch
      %74 = sbr.rel (0) target = $region45
    $region44: #{gin_forward.1} parent=1 // pred_region
      %s76 = ssub.s32 16, 16
      %77 = vsyncadd [#allocation8], %s76
      %s79 = sshll.u32 [#allocation7], 4
      %s80 = int_to_ptr.vmem [resolvable:$true] %s79
      %82 = dma.hbm_to_vmem [thread:$0]  %s10, 16, %s80, [#allocation8]
    $region45: #{gin_forward.1} parent=1 // pred_fallthru
      _
    // Predicated region
    $region46: #{gin_forward.1} parent=1 // pred_check
      _
    $region47: #{gin_forward.1} parent=1 // pred_check_branch
      %84 = sbr.rel (0) target = $region49
    $region48: #{gin_forward.1} parent=1 // pred_region
      _
    $region49: #{gin_forward.1} parent=1 // pred_fallthru
      _
    // Predicated region
    $region50: #{gin_forward.1} parent=1 // pred_check
      _
    $region51: #{gin_forward.1} parent=1 // pred_check_branch
      %86 = sbr.rel (0) target = $region53
    $region52: #{gin_forward.1} parent=1 // pred_region
      _
    $region53: #{gin_forward.1} parent=1 // pred_fallthru
      _
    // Predicated region
    $region54: #{gin_forward.1} parent=1 // pred_check
      _
    $region55: #{gin_forward.1} parent=1 // pred_check_branch
      %88 = sbr.rel (0) target = $region57
    $region56: #{gin_forward.1} parent=1 // pred_region
      %s90 = ssub.s32 256, 256
      %91 = vsyncadd [#allocation8], %s90
      %s92 = sshll.u32 [#allocation9], 4
      %s93 = int_to_ptr.vmem [resolvable:$true] %s92
      %98 = dma.hbm_to_vmem [thread:$0]  %s13, 256, %s93, [#allocation8], 64, 64, 4
    $region57: #{gin_forward.1} parent=1 // pred_fallthru
      _
    // Predicated region
    $region58: #{gin_forward.1} parent=1 // pred_check
      _
    $region59: #{gin_forward.1} parent=1 // pred_check_branch
      %100 = sbr.rel (0) target = $region61
    $region60: #{gin_forward.1} parent=1 // pred_region
      _
    $region61: #{gin_forward.1} parent=1 // pred_fallthru
      _
    // Predicated region
    $region62: #{gin_forward.1} parent=1 // pred_check
      _
    $region63: #{gin_forward.1} parent=1 // pred_check_branch
      %102 = sbr.rel (0) target = $region65
    $region64: #{gin_forward.1} parent=1 // pred_region
      %103 = dma.done [#allocation3], 128
    $region65: #{gin_forward.1} parent=1 // pred_fallthru
      _
    // Predicated region
    $region66: #{gin_forward.1} parent=1 // pred_check
      _
    $region67: #{gin_forward.1} parent=1 // pred_check_branch
      %105 = sbr.rel (0) target = $region69
    $region68: #{gin_forward.1} parent=1 // pred_region
      %106 = dma.done [#allocation5], 128
    $region69: #{gin_forward.1} parent=1 // pred_fallthru
      _
    // Predicated region
    $region70: #{gin_forward.1} parent=1 // pred_check
      _
    $region71: #{gin_forward.1} parent=1 // pred_check_branch
      %108 = sbr.rel (0) target = $region73
    $region72: #{gin_forward.1} parent=1 // pred_region
      %109 = dma.done [#allocation5], 256
    $region73: #{gin_forward.1} parent=1 // pred_fallthru
      _
    // Predicated region
    $region74: #{gin_forward.1} parent=1 // pred_check
      _
    $region75: #{gin_forward.1} parent=1 // pred_check_branch
      %111 = sbr.rel (0) target = $region77
    $region76: #{gin_forward.1} parent=1 // pred_region
      %112 = dma.done [#allocation8], 16
    $region77: #{gin_forward.1} parent=1 // pred_fallthru
      _
    // Predicated region
    $region78: #{gin_forward.1} parent=1 // pred_check
      _
    $region79: #{gin_forward.1} parent=1 // pred_check_branch
      %114 = sbr.rel (0) target = $region81
    $region80: #{gin_forward.1} parent=1 // pred_region
      %115 = dma.done [#allocation8], 256
    $region81: #{gin_forward.1} parent=1 // pred_fallthru
      _
    %v117 = vld [vmem:[%s0] sm:$0xf]
    %v118 = vld [vmem:[%s0 + $0x4] sm:$0xf]
    %v119 = vunpack.c.l.bf16 %v117
    %v120 = vunpack.c.l.bf16 %v118
    %v121 = vld [vmem:[#allocation2] sm:$0xf]
    %v122 = vld [vmem:[#allocation2 + $0x4] sm:$0xf]
    %v125 = vunpack.c.l.b16 %v121
    %v126 = vunpack.c.l.b16 %v122
    %v127 = vpack.c.b16 %v126, %v125
    %v130 = vunpack.c.l.b16 %v117
    %v131 = vunpack.c.l.b16 %v118
    %v132 = vpack.c.b16 %v131, %v130
    %vm134 = vcmask 130048
    %v136 = vsel %vm134, %v127, 0
    %138 = vmatprep.subr.bf16.mxu0 0
    %139 = vmatpush1.bf16.msra.mxu0 %v132
    %140 = vmatprep.subr.bf16.mxu0 0
    %141 = vmatpush1.bf16.msra.mxu0 0
    %142 = vmatprep.subr.bf16.mxu0 0
    %143 = vmatpush1.bf16.msra.mxu0 0
    %144 = vmatprep.subr.bf16.mxu0 0
    %145 = vmatpush1.bf16.msra.mxu0 0
    %146 = vmatprep.subr.bf16.mxu0 0
    %147 = vmatpush1.bf16.msra.mxu0 0
    %148 = vmatprep.subr.bf16.mxu0 0
    %149 = vmatpush1.bf16.msra.mxu0 0
    %150 = vmatprep.subr.bf16.mxu0 0
    %151 = vmatpush1.bf16.msra.mxu0 0
    %152 = vmatprep.subr.bf16.mxu0 0
    %153 = vmatpush1.bf16.msra.mxu0 0
    %154 = vmatprep.subr.bf16.mxu0 0
    %155 = vmatpush1.bf16.msra.mxu0 0
    %156 = vmatprep.subr.bf16.mxu0 0
    %157 = vmatpush1.bf16.msra.mxu0 0
    %158 = vmatprep.subr.bf16.mxu0 0
    %159 = vmatpush1.bf16.msra.mxu0 0
    %160 = vmatprep.subr.bf16.mxu0 0
    %161 = vmatpush1.bf16.msra.mxu0 0
    %162 = vmatprep.subr.bf16.mxu0 0
    %163 = vmatpush1.bf16.msra.mxu0 0
    %164 = vmatprep.subr.bf16.mxu0 0
    %165 = vmatpush1.bf16.msra.mxu0 0
    %166 = vmatprep.subr.bf16.mxu0 0
    %167 = vmatpush1.bf16.msra.mxu0 0
    %168 = vmatprep.subr.bf16.mxu0 0
    %169 = vmatpush1.bf16.msra.mxu0 0
    %170 = vmatprep.mubr.bf16.mxu0 0
    %171 = vmatmul.mubr.bf16.gmra.mrb[0].mxu0 %v136
    %v172 = vpop.f32.mrb[0].mxu0
    %v173 = vadd.f32 %v119, %v172
    %v174 = vpop.f32.mrb[0].mxu0
    %v175 = vpop.f32.mrb[0].mxu0
    %v176 = vadd.f32 %v120, %v175
    %v177 = vpop.f32.mrb[0].mxu0
    %178 = vdwg.mxu0
    %v179 = vpack.c.bf16 %v176, %v173
    %v180 = vld [vmem:[#allocation4] sm:$0xf]
    %v181 = vld [vmem:[#allocation4 + $0x4] sm:$0xf]
    %v184 = vunpack.c.l.b16 %v180
    %v185 = vunpack.c.l.b16 %v181
    %v186 = vpack.c.b16 %v185, %v184
    %v189 = vsel %vm134, %v179, 0
    %191 = vmatprep.subr.bf16.mxu0 0
    %192 = vmatpush1.bf16.msra.mxu0 %v186
    %193 = vmatprep.subr.bf16.mxu0 0
    %194 = vmatpush1.bf16.msra.mxu0 0
    %195 = vmatprep.subr.bf16.mxu0 0
    %196 = vmatpush1.bf16.msra.mxu0 0
    %197 = vmatprep.subr.bf16.mxu0 0
    %198 = vmatpush1.bf16.msra.mxu0 0
    %199 = vmatprep.subr.bf16.mxu0 0
    %200 = vmatpush1.bf16.msra.mxu0 0
    %201 = vmatprep.subr.bf16.mxu0 0
    %202 = vmatpush1.bf16.msra.mxu0 0
    %203 = vmatprep.subr.bf16.mxu0 0
    %204 = vmatpush1.bf16.msra.mxu0 0
    %205 = vmatprep.subr.bf16.mxu0 0
    %206 = vmatpush1.bf16.msra.mxu0 0
    %207 = vmatprep.subr.bf16.mxu0 0
    %208 = vmatpush1.bf16.msra.mxu0 0
    %209 = vmatprep.subr.bf16.mxu0 0
    %210 = vmatpush1.bf16.msra.mxu0 0
    %211 = vmatprep.subr.bf16.mxu0 0
    %212 = vmatpush1.bf16.msra.mxu0 0
    %213 = vmatprep.subr.bf16.mxu0 0
    %214 = vmatpush1.bf16.msra.mxu0 0
    %215 = vmatprep.subr.bf16.mxu0 0
    %216 = vmatpush1.bf16.msra.mxu0 0
    %217 = vmatprep.subr.bf16.mxu0 0
    %218 = vmatpush1.bf16.msra.mxu0 0
    %219 = vmatprep.subr.bf16.mxu0 0
    %220 = vmatpush1.bf16.msra.mxu0 0
    %221 = vmatprep.subr.bf16.mxu0 0
    %222 = vmatpush1.bf16.msra.mxu0 0
    %223 = vmatprep.mubr.bf16.mxu0 0
    %224 = vmatmul.mubr.bf16.gmra.mrb[0].mxu0 %v189
    %v225 = vpop.f32.mrb[0].mxu0
    %v226 = vadd.f32 0.0, %v225
    %v227 = vpop.f32.mrb[0].mxu0
    %v228 = vpop.f32.mrb[0].mxu0
    %v229 = vadd.f32 0.0, %v228
    %v230 = vpop.f32.mrb[0].mxu0
    %231 = vdwg.mxu0
    %v232 = vmax.f32 %v226, 0.0
    %v233 = vmax.f32 %v229, 0.0
    %v234 = vpack.c.bf16 %v233, %v232
    %v235 = vld [vmem:[%s5] sm:$0xf]
    %v236 = vld [vmem:[%s5 + $0x4] sm:$0xf]
    %v237 = vld [vmem:[%s5 + $0x8] sm:$0xf]
    %v238 = vld [vmem:[%s5 + $0xc] sm:$0xf]
    %v243 = vunpack.c.l.b16 %v235
    %v244 = vunpack.c.l.b16 %v236
    %v245 = vunpack.c.l.b16 %v237
    %v246 = vunpack.c.l.b16 %v238
    %v247 = vpack.c.b16 %v244, %v243
    %v248 = vpack.c.b16 %v246, %v245
    %vm251 = vcmask 261120
    %v253 = vsel %vm251, %v234, 0
    %255 = vmatprep.subr.bf16.mxu0 0
    %256 = vmatpush1.bf16.msra.mxu0 %v247
    %257 = vmatprep.subr.bf16.mxu0 0
    %258 = vmatpush1.bf16.msra.mxu0 %v248
    %259 = vmatprep.subr.bf16.mxu0 0
    %260 = vmatpush1.bf16.msra.mxu0 0
    %261 = vmatprep.subr.bf16.mxu0 0
    %262 = vmatpush1.bf16.msra.mxu0 0
    %263 = vmatprep.subr.bf16.mxu0 0
    %264 = vmatpush1.bf16.msra.mxu0 0
    %265 = vmatprep.subr.bf16.mxu0 0
    %266 = vmatpush1.bf16.msra.mxu0 0
    %267 = vmatprep.subr.bf16.mxu0 0
    %268 = vmatpush1.bf16.msra.mxu0 0
    %269 = vmatprep.subr.bf16.mxu0 0
    %270 = vmatpush1.bf16.msra.mxu0 0
    %271 = vmatprep.subr.bf16.mxu0 0
    %272 = vmatpush1.bf16.msra.mxu0 0
    %273 = vmatprep.subr.bf16.mxu0 0
    %274 = vmatpush1.bf16.msra.mxu0 0
    %275 = vmatprep.subr.bf16.mxu0 0
    %276 = vmatpush1.bf16.msra.mxu0 0
    %277 = vmatprep.subr.bf16.mxu0 0
    %278 = vmatpush1.bf16.msra.mxu0 0
    %279 = vmatprep.subr.bf16.mxu0 0
    %280 = vmatpush1.bf16.msra.mxu0 0
    %281 = vmatprep.subr.bf16.mxu0 0
    %282 = vmatpush1.bf16.msra.mxu0 0
    %283 = vmatprep.subr.bf16.mxu0 0
    %284 = vmatpush1.bf16.msra.mxu0 0
    %285 = vmatprep.subr.bf16.mxu0 0
    %286 = vmatpush1.bf16.msra.mxu0 0
    %287 = vmatprep.mubr.bf16.mxu0 0
    %288 = vmatmul.mubr.bf16.gmra.mrb[0].mxu0 %v253
    %v289 = vpop.f32.mrb[0].mxu0
    %v290 = vadd.f32 0.0, %v289
    %v291 = vpop.f32.mrb[0].mxu0
    %v292 = vpop.f32.mrb[0].mxu0
    %v293 = vadd.f32 0.0, %v292
    %v294 = vpop.f32.mrb[0].mxu0
    %295 = vdwg.mxu0
    %v296 = vmax.f32 %v290, 0.0
    %v297 = vmax.f32 %v293, 0.0
    %v298 = vpack.c.bf16 %v297, %v296
    %299 = vmatprep.subr.bf16.mxu0 0
    %300 = vmatpush1.bf16.msra.mxu0 %v298
    %301 = vmatprep.subr.bf16.mxu0 0
    %302 = vmatpush1.bf16.msra.mxu0 0
    %303 = vmatprep.subr.bf16.mxu0 0
    %304 = vmatpush1.bf16.msra.mxu0 0
    %305 = vmatprep.subr.bf16.mxu0 0
    %306 = vmatpush1.bf16.msra.mxu0 0
    %307 = vmatprep.subr.bf16.mxu0 0
    %308 = vmatpush1.bf16.msra.mxu0 0
    %309 = vmatprep.subr.bf16.mxu0 0
    %310 = vmatpush1.bf16.msra.mxu0 0
    %311 = vmatprep.subr.bf16.mxu0 0
    %312 = vmatpush1.bf16.msra.mxu0 0
    %313 = vmatprep.subr.bf16.mxu0 0
    %314 = vmatpush1.bf16.msra.mxu0 0
    %315 = vmatprep.subr.bf16.mxu0 0
    %316 = vmatpush1.bf16.msra.mxu0 0
    %317 = vmatprep.subr.bf16.mxu0 0
    %318 = vmatpush1.bf16.msra.mxu0 0
    %319 = vmatprep.subr.bf16.mxu0 0
    %320 = vmatpush1.bf16.msra.mxu0 0
    %321 = vmatprep.subr.bf16.mxu0 0
    %322 = vmatpush1.bf16.msra.mxu0 0
    %323 = vmatprep.subr.bf16.mxu0 0
    %324 = vmatpush1.bf16.msra.mxu0 0
    %325 = vmatprep.subr.bf16.mxu0 0
    %326 = vmatpush1.bf16.msra.mxu0 0
    %327 = vmatprep.subr.bf16.mxu0 0
    %328 = vmatpush1.bf16.msra.mxu0 0
    %329 = vmatprep.subr.bf16.mxu0 0
    %330 = vmatpush1.bf16.msra.mxu0 0
    %331 = vmatprep.mubr.bf16.mxu0 0
    %332 = vmatmul.mubr.bf16.gmra.mrb[0].mxu0 %v136
    %v333 = vpop.f32.mrb[0].mxu0
    %v334 = vadd.f32 %v296, %v333
    %v335 = vpop.f32.mrb[0].mxu0
    %v336 = vpop.f32.mrb[0].mxu0
    %v337 = vadd.f32 %v297, %v336
    %v338 = vpop.f32.mrb[0].mxu0
    %339 = vdwg.mxu0
    %v340 = vpack.c.bf16 %v337, %v334
    %v341 = vld [vmem:[%s3] sm:$0xf]
    %v342 = vld [vmem:[%s3 + $0x4] sm:$0xf]
    %v343 = vld [vmem:[%s3 + $0x8] sm:$0xf]
    %v344 = vld [vmem:[%s3 + $0xc] sm:$0xf]
    %v349 = vunpack.c.l.b16 %v341
    %v350 = vunpack.c.l.b16 %v342
    %v351 = vunpack.c.l.b16 %v343
    %v352 = vunpack.c.l.b16 %v344
    %v353 = vpack.c.b16 %v350, %v349
    %v354 = vpack.c.b16 %v352, %v351
    %v358 = vsel %vm251, %v340, 0
    %360 = vmatprep.subr.bf16.mxu0 0
    %361 = vmatpush1.bf16.msra.mxu0 %v353
    %362 = vmatprep.subr.bf16.mxu0 0
    %363 = vmatpush1.bf16.msra.mxu0 %v354
    %364 = vmatprep.subr.bf16.mxu0 0
    %365 = vmatpush1.bf16.msra.mxu0 0
    %366 = vmatprep.subr.bf16.mxu0 0
    %367 = vmatpush1.bf16.msra.mxu0 0
    %368 = vmatprep.subr.bf16.mxu0 0
    %369 = vmatpush1.bf16.msra.mxu0 0
    %370 = vmatprep.subr.bf16.mxu0 0
    %371 = vmatpush1.bf16.msra.mxu0 0
    %372 = vmatprep.subr.bf16.mxu0 0
    %373 = vmatpush1.bf16.msra.mxu0 0
    %374 = vmatprep.subr.bf16.mxu0 0
    %375 = vmatpush1.bf16.msra.mxu0 0
    %376 = vmatprep.subr.bf16.mxu0 0
    %377 = vmatpush1.bf16.msra.mxu0 0
    %378 = vmatprep.subr.bf16.mxu0 0
    %379 = vmatpush1.bf16.msra.mxu0 0
    %380 = vmatprep.subr.bf16.mxu0 0
    %381 = vmatpush1.bf16.msra.mxu0 0
    %382 = vmatprep.subr.bf16.mxu0 0
    %383 = vmatpush1.bf16.msra.mxu0 0
    %384 = vmatprep.subr.bf16.mxu0 0
    %385 = vmatpush1.bf16.msra.mxu0 0
    %386 = vmatprep.subr.bf16.mxu0 0
    %387 = vmatpush1.bf16.msra.mxu0 0
    %388 = vmatprep.subr.bf16.mxu0 0
    %389 = vmatpush1.bf16.msra.mxu0 0
    %390 = vmatprep.subr.bf16.mxu0 0
    %391 = vmatpush1.bf16.msra.mxu0 0
    %392 = vmatprep.mubr.bf16.mxu0 0
    %393 = vmatmul.mubr.bf16.gmra.mrb[0].mxu0 %v358
    %v394 = vpop.f32.mrb[0].mxu0
    %v395 = vadd.f32 0.0, %v394
    %v396 = vpop.f32.mrb[0].mxu0
    %v397 = vpop.f32.mrb[0].mxu0
    %v398 = vadd.f32 0.0, %v397
    %v399 = vpop.f32.mrb[0].mxu0
    %400 = vdwg.mxu0
    %v401 = vmax.f32 %v395, 0.0
    %v402 = vmax.f32 %v398, 0.0
    %v403 = vpack.c.bf16 %v402, %v401
    %v404 = vld [vmem:[%s6] sm:$0xf]
    %v405 = vld [vmem:[%s6 + $0x4] sm:$0xf]
    %v406 = vld [vmem:[%s6 + $0x8] sm:$0xf]
    %v407 = vld [vmem:[%s6 + $0xc] sm:$0xf]
    %v412 = vunpack.c.l.b16 %v404
    %v413 = vunpack.c.l.b16 %v405
    %v414 = vunpack.c.l.b16 %v406
    %v415 = vunpack.c.l.b16 %v407
    %v416 = vpack.c.b16 %v413, %v412
    %v417 = vpack.c.b16 %v415, %v414
    %v421 = vsel %vm251, %v403, 0
    %423 = vmatprep.subr.bf16.mxu0 0
    %424 = vmatpush1.bf16.msra.mxu0 %v416
    %425 = vmatprep.subr.bf16.mxu0 0
    %426 = vmatpush1.bf16.msra.mxu0 %v417
    %427 = vmatprep.subr.bf16.mxu0 0
    %428 = vmatpush1.bf16.msra.mxu0 0
    %429 = vmatprep.subr.bf16.mxu0 0
    %430 = vmatpush1.bf16.msra.mxu0 0
    %431 = vmatprep.subr.bf16.mxu0 0
    %432 = vmatpush1.bf16.msra.mxu0 0
    %433 = vmatprep.subr.bf16.mxu0 0
    %434 = vmatpush1.bf16.msra.mxu0 0
    %435 = vmatprep.subr.bf16.mxu0 0
    %436 = vmatpush1.bf16.msra.mxu0 0
    %437 = vmatprep.subr.bf16.mxu0 0
    %438 = vmatpush1.bf16.msra.mxu0 0
    %439 = vmatprep.subr.bf16.mxu0 0
    %440 = vmatpush1.bf16.msra.mxu0 0
    %441 = vmatprep.subr.bf16.mxu0 0
    %442 = vmatpush1.bf16.msra.mxu0 0
    %443 = vmatprep.subr.bf16.mxu0 0
    %444 = vmatpush1.bf16.msra.mxu0 0
    %445 = vmatprep.subr.bf16.mxu0 0
    %446 = vmatpush1.bf16.msra.mxu0 0
    %447 = vmatprep.subr.bf16.mxu0 0
    %448 = vmatpush1.bf16.msra.mxu0 0
    %449 = vmatprep.subr.bf16.mxu0 0
    %450 = vmatpush1.bf16.msra.mxu0 0
    %451 = vmatprep.subr.bf16.mxu0 0
    %452 = vmatpush1.bf16.msra.mxu0 0
    %453 = vmatprep.subr.bf16.mxu0 0
    %454 = vmatpush1.bf16.msra.mxu0 0
    %455 = vmatprep.mubr.bf16.mxu0 0
    %456 = vmatmul.mubr.bf16.gmra.mrb[0].mxu0 %v421
    %v457 = vpop.f32.mrb[0].mxu0
    %v458 = vadd.f32 0.0, %v457
    %v459 = vpop.f32.mrb[0].mxu0
    %v460 = vpop.f32.mrb[0].mxu0
    %v461 = vadd.f32 0.0, %v460
    %v462 = vpop.f32.mrb[0].mxu0
    %463 = vdwg.mxu0
    %v464 = vmax.f32 %v458, 0.0
    %v465 = vmax.f32 %v461, 0.0
    %v466 = vpack.c.bf16 %v465, %v464
    %467 = vmatprep.subr.bf16.mxu0 0
    %468 = vmatpush1.bf16.msra.mxu0 %v466
    %469 = vmatprep.subr.bf16.mxu0 0
    %470 = vmatpush1.bf16.msra.mxu0 0
    %471 = vmatprep.subr.bf16.mxu0 0
    %472 = vmatpush1.bf16.msra.mxu0 0
    %473 = vmatprep.subr.bf16.mxu0 0
    %474 = vmatpush1.bf16.msra.mxu0 0
    %475 = vmatprep.subr.bf16.mxu0 0
    %476 = vmatpush1.bf16.msra.mxu0 0
    %477 = vmatprep.subr.bf16.mxu0 0
    %478 = vmatpush1.bf16.msra.mxu0 0
    %479 = vmatprep.subr.bf16.mxu0 0
    %480 = vmatpush1.bf16.msra.mxu0 0
    %481 = vmatprep.subr.bf16.mxu0 0
    %482 = vmatpush1.bf16.msra.mxu0 0
    %483 = vmatprep.subr.bf16.mxu0 0
    %484 = vmatpush1.bf16.msra.mxu0 0
    %485 = vmatprep.subr.bf16.mxu0 0
    %486 = vmatpush1.bf16.msra.mxu0 0
    %487 = vmatprep.subr.bf16.mxu0 0
    %488 = vmatpush1.bf16.msra.mxu0 0
    %489 = vmatprep.subr.bf16.mxu0 0
    %490 = vmatpush1.bf16.msra.mxu0 0
    %491 = vmatprep.subr.bf16.mxu0 0
    %492 = vmatpush1.bf16.msra.mxu0 0
    %493 = vmatprep.subr.bf16.mxu0 0
    %494 = vmatpush1.bf16.msra.mxu0 0
    %495 = vmatprep.subr.bf16.mxu0 0
    %496 = vmatpush1.bf16.msra.mxu0 0
    %497 = vmatprep.subr.bf16.mxu0 0
    %498 = vmatpush1.bf16.msra.mxu0 0
    %499 = vmatprep.mubr.bf16.mxu0 0
    %500 = vmatmul.mubr.bf16.gmra.mrb[0].mxu0 %v136
    %v501 = vpop.f32.mrb[0].mxu0
    %v502 = vadd.f32 %v464, %v501
    %v503 = vpop.f32.mrb[0].mxu0
    %v504 = vpop.f32.mrb[0].mxu0
    %v505 = vadd.f32 %v465, %v504
    %v506 = vpop.f32.mrb[0].mxu0
    %507 = vdwg.mxu0
    %v508 = vpack.c.bf16 %v505, %v502
    %v509 = vld [vmem:[%s4] sm:$0xf]
    %v510 = vld [vmem:[%s4 + $0x4] sm:$0xf]
    %v511 = vld [vmem:[%s4 + $0x8] sm:$0xf]
    %v512 = vld [vmem:[%s4 + $0xc] sm:$0xf]
    %v517 = vunpack.c.l.b16 %v509
    %v518 = vunpack.c.l.b16 %v510
    %v519 = vunpack.c.l.b16 %v511
    %v520 = vunpack.c.l.b16 %v512
    %v521 = vpack.c.b16 %v518, %v517
    %v522 = vpack.c.b16 %v520, %v519
    %v526 = vsel %vm251, %v508, 0
    %528 = vmatprep.subr.bf16.mxu0 0
    %529 = vmatpush1.bf16.msra.mxu0 %v521
    %530 = vmatprep.subr.bf16.mxu0 0
    %531 = vmatpush1.bf16.msra.mxu0 %v522
    %532 = vmatprep.subr.bf16.mxu0 0
    %533 = vmatpush1.bf16.msra.mxu0 0
    %534 = vmatprep.subr.bf16.mxu0 0
    %535 = vmatpush1.bf16.msra.mxu0 0
    %536 = vmatprep.subr.bf16.mxu0 0
    %537 = vmatpush1.bf16.msra.mxu0 0
    %538 = vmatprep.subr.bf16.mxu0 0
    %539 = vmatpush1.bf16.msra.mxu0 0
    %540 = vmatprep.subr.bf16.mxu0 0
    %541 = vmatpush1.bf16.msra.mxu0 0
    %542 = vmatprep.subr.bf16.mxu0 0
    %543 = vmatpush1.bf16.msra.mxu0 0
    %544 = vmatprep.subr.bf16.mxu0 0
    %545 = vmatpush1.bf16.msra.mxu0 0
    %546 = vmatprep.subr.bf16.mxu0 0
    %547 = vmatpush1.bf16.msra.mxu0 0
    %548 = vmatprep.subr.bf16.mxu0 0
    %549 = vmatpush1.bf16.msra.mxu0 0
    %550 = vmatprep.subr.bf16.mxu0 0
    %551 = vmatpush1.bf16.msra.mxu0 0
    %552 = vmatprep.subr.bf16.mxu0 0
    %553 = vmatpush1.bf16.msra.mxu0 0
    %554 = vmatprep.subr.bf16.mxu0 0
    %555 = vmatpush1.bf16.msra.mxu0 0
    %556 = vmatprep.subr.bf16.mxu0 0
    %557 = vmatpush1.bf16.msra.mxu0 0
    %558 = vmatprep.subr.bf16.mxu0 0
    %559 = vmatpush1.bf16.msra.mxu0 0
    %560 = vmatprep.mubr.bf16.mxu0 0
    %561 = vmatmul.mubr.bf16.gmra.mrb[0].mxu0 %v526
    %v562 = vpop.f32.mrb[0].mxu0
    %v563 = vadd.f32 0.0, %v562
    %v564 = vpop.f32.mrb[0].mxu0
    %v565 = vpop.f32.mrb[0].mxu0
    %v566 = vadd.f32 0.0, %v565
    %v567 = vpop.f32.mrb[0].mxu0
    %568 = vdwg.mxu0
    %v569 = vmax.f32 %v563, 0.0
    %v570 = vmax.f32 %v566, 0.0
    %v571 = vpack.c.bf16 %v570, %v569
    %v572 = vld [vmem:[%s7] sm:$0xf]
    %v573 = vld [vmem:[%s7 + $0x4] sm:$0xf]
    %v574 = vld [vmem:[%s7 + $0x8] sm:$0xf]
    %v575 = vld [vmem:[%s7 + $0xc] sm:$0xf]
    %v580 = vunpack.c.l.b16 %v572
    %v581 = vunpack.c.l.b16 %v573
    %v582 = vunpack.c.l.b16 %v574
    %v583 = vunpack.c.l.b16 %v575
    %v584 = vpack.c.b16 %v581, %v580
    %v585 = vpack.c.b16 %v583, %v582
    %v589 = vsel %vm251, %v571, 0
    %591 = vmatprep.subr.bf16.mxu0 0
    %592 = vmatpush1.bf16.msra.mxu0 %v584
    %593 = vmatprep.subr.bf16.mxu0 0
    %594 = vmatpush1.bf16.msra.mxu0 %v585
    %595 = vmatprep.subr.bf16.mxu0 0
    %596 = vmatpush1.bf16.msra.mxu0 0
    %597 = vmatprep.subr.bf16.mxu0 0
    %598 = vmatpush1.bf16.msra.mxu0 0
    %599 = vmatprep.subr.bf16.mxu0 0
    %600 = vmatpush1.bf16.msra.mxu0 0
    %601 = vmatprep.subr.bf16.mxu0 0
    %602 = vmatpush1.bf16.msra.mxu0 0
    %603 = vmatprep.subr.bf16.mxu0 0
    %604 = vmatpush1.bf16.msra.mxu0 0
    %605 = vmatprep.subr.bf16.mxu0 0
    %606 = vmatpush1.bf16.msra.mxu0 0
    %607 = vmatprep.subr.bf16.mxu0 0
    %608 = vmatpush1.bf16.msra.mxu0 0
    %609 = vmatprep.subr.bf16.mxu0 0
    %610 = vmatpush1.bf16.msra.mxu0 0
    %611 = vmatprep.subr.bf16.mxu0 0
    %612 = vmatpush1.bf16.msra.mxu0 0
    %613 = vmatprep.subr.bf16.mxu0 0
    %614 = vmatpush1.bf16.msra.mxu0 0
    %615 = vmatprep.subr.bf16.mxu0 0
    %616 = vmatpush1.bf16.msra.mxu0 0
    %617 = vmatprep.subr.bf16.mxu0 0
    %618 = vmatpush1.bf16.msra.mxu0 0
    %619 = vmatprep.subr.bf16.mxu0 0
    %620 = vmatpush1.bf16.msra.mxu0 0
    %621 = vmatprep.subr.bf16.mxu0 0
    %622 = vmatpush1.bf16.msra.mxu0 0
    %623 = vmatprep.mubr.bf16.mxu0 0
    %624 = vmatmul.mubr.bf16.gmra.mrb[0].mxu0 %v589
    %v625 = vpop.f32.mrb[0].mxu0
    %v626 = vadd.f32 0.0, %v625
    %v627 = vpop.f32.mrb[0].mxu0
    %v628 = vpop.f32.mrb[0].mxu0
    %v629 = vadd.f32 0.0, %v628
    %v630 = vpop.f32.mrb[0].mxu0
    %631 = vdwg.mxu0
    %v632 = vpack.c.bf16 %v629, %v626
    %v633 = vld [vmem:[%s8] sm:$0xff]
    %v634 = vld [vmem:[%s8 + $0x8] sm:$0xff]
    %v635 = vld [vmem:[%s8 + $0x10] sm:$0xff]
    %v636 = vld [vmem:[%s8 + $0x18] sm:$0xff]
    %v637 = vlaneseq
    %v638 = vand.u32 %v637, 127
    %639 = vset.pattern.permute.xlu0 0
    %640 = vperm.xlu0 %639, %v633
    %v641 = vpop.permute.xlu0 %640
    %642 = vset.pattern.permute.xlu0 0
    %643 = vperm.xlu0 %642, %v634
    %v644 = vpop.permute.xlu0 %643
    %645 = vset.pattern.permute.xlu0 0
    %646 = vperm.xlu0 %645, %v635
    %v647 = vpop.permute.xlu0 %646
    %648 = vset.pattern.permute.xlu0 0
    %649 = vperm.xlu0 %648, %v636
    %v650 = vpop.permute.xlu0 %649
    %vm651 = vcmp.eq.s32.totalorder %v641, %v638
    %vm652 = vcmp.eq.s32.totalorder %v644, %v638
    %vm653 = vcmp.eq.s32.totalorder %v647, %v638
    %vm654 = vcmp.eq.s32.totalorder %v650, %v638
    %v655 = vsel %vm651, 1, 0
    %v656 = vsel %vm652, 1, 0
    %v657 = vsel %vm653, 1, 0
    %v658 = vsel %vm654, 1, 0
    %v659 = vcvt.s32.f32 %v655
    %v660 = vcvt.s32.f32 %v656
    %v661 = vcvt.s32.f32 %v657
    %v662 = vcvt.s32.f32 %v658
    %v663 = vpack.c.bf16 %v660, %v659
    %v664 = vpack.c.bf16 %v662, %v661
    %v666 = vsel %vm134, %v663, 0
    %v669 = vsel %vm134, %v664, 0
    %671 = vmatprep.subr.bf16.mxu0 0
    %672 = vmatpush1.bf16.msra.mxu0 %v632
    %673 = vmatprep.subr.bf16.mxu0 0
    %674 = vmatpush1.bf16.msra.mxu0 0
    %675 = vmatprep.subr.bf16.mxu0 0
    %676 = vmatpush1.bf16.msra.mxu0 0
    %677 = vmatprep.subr.bf16.mxu0 0
    %678 = vmatpush1.bf16.msra.mxu0 0
    %679 = vmatprep.subr.bf16.mxu0 0
    %680 = vmatpush1.bf16.msra.mxu0 0
    %681 = vmatprep.subr.bf16.mxu0 0
    %682 = vmatpush1.bf16.msra.mxu0 0
    %683 = vmatprep.subr.bf16.mxu0 0
    %684 = vmatpush1.bf16.msra.mxu0 0
    %685 = vmatprep.subr.bf16.mxu0 0
    %686 = vmatpush1.bf16.msra.mxu0 0
    %687 = vmatprep.subr.bf16.mxu0 0
    %688 = vmatpush1.bf16.msra.mxu0 0
    %689 = vmatprep.subr.bf16.mxu0 0
    %690 = vmatpush1.bf16.msra.mxu0 0
    %691 = vmatprep.subr.bf16.mxu0 0
    %692 = vmatpush1.bf16.msra.mxu0 0
    %693 = vmatprep.subr.bf16.mxu0 0
    %694 = vmatpush1.bf16.msra.mxu0 0
    %695 = vmatprep.subr.bf16.mxu0 0
    %696 = vmatpush1.bf16.msra.mxu0 0
    %697 = vmatprep.subr.bf16.mxu0 0
    %698 = vmatpush1.bf16.msra.mxu0 0
    %699 = vmatprep.subr.bf16.mxu0 0
    %700 = vmatpush1.bf16.msra.mxu0 0
    %701 = vmatprep.subr.bf16.mxu0 0
    %702 = vmatpush1.bf16.msra.mxu0 0
    %703 = vmatprep.mubr.bf16.mxu0 0
    %704 = vmatmul.mubr.bf16.gmra.mrb[0].mxu0 %v666
    %v705 = vpop.f32.mrb[0].mxu0
    %v706 = vadd.f32 0.0, %v705
    %v707 = vpop.f32.mrb[0].mxu0
    %v708 = vpop.f32.mrb[0].mxu0
    %v709 = vadd.f32 0.0, %v708
    %v710 = vpop.f32.mrb[0].mxu0
    %711 = vmatprep.mubr.bf16.mxu0 0
    %712 = vmatmul.mubr.bf16.gmra.mrb[0].mxu0 %v669
    %v713 = vpop.f32.mrb[0].mxu0
    %v714 = vadd.f32 0.0, %v713
    %v715 = vpop.f32.mrb[0].mxu0
    %v716 = vpop.f32.mrb[0].mxu0
    %v717 = vadd.f32 0.0, %v716
    %v718 = vpop.f32.mrb[0].mxu0
    %719 = vdwg.mxu0
    %v720 = vmul.f32 %v706, %v714
    %v721 = vmul.f32 %v709, %v717
    %v722 = vpack.c.bf16 %v721, %v720
    %v723 = vld [vmem:[#allocation6] sm:$0xf]
    %v724 = vld [vmem:[#allocation6 + $0x4] sm:$0xf]
    %v725 = vld [vmem:[#allocation6 + $0x8] sm:$0xf]
    %v726 = vld [vmem:[#allocation6 + $0xc] sm:$0xf]
    %v727 = vld [vmem:[#allocation7] sm:$0x1]
    %v729 = vlaneseq
    %v730 = vshrl.u32 %v729, 7
    %v731 = vsub.s32 0, %v730
    %v732 = vrot.slane %v727, %v731
    %v738 = vunpack.c.l.b16 %v723
    %v739 = vunpack.c.l.b16 %v724
    %v740 = vunpack.c.l.b16 %v725
    %v741 = vunpack.c.l.b16 %v726
    %v742 = vpack.c.b16 %v739, %v738
    %v743 = vpack.c.b16 %v741, %v740
    %v747 = vsel %vm251, %v722, 0
    %749 = vmatprep.subr.bf16.mxu0 0
    %750 = vmatpush1.bf16.msra.mxu0 %v742
    %751 = vmatprep.subr.bf16.mxu0 0
    %752 = vmatpush1.bf16.msra.mxu0 %v743
    %753 = vmatprep.subr.bf16.mxu0 0
    %754 = vmatpush1.bf16.msra.mxu0 0
    %755 = vmatprep.subr.bf16.mxu0 0
    %756 = vmatpush1.bf16.msra.mxu0 0
    %757 = vmatprep.subr.bf16.mxu0 0
    %758 = vmatpush1.bf16.msra.mxu0 0
    %759 = vmatprep.subr.bf16.mxu0 0
    %760 = vmatpush1.bf16.msra.mxu0 0
    %761 = vmatprep.subr.bf16.mxu0 0
    %762 = vmatpush1.bf16.msra.mxu0 0
    %763 = vmatprep.subr.bf16.mxu0 0
    %764 = vmatpush1.bf16.msra.mxu0 0
    %765 = vmatprep.subr.bf16.mxu0 0
    %766 = vmatpush1.bf16.msra.mxu0 0
    %767 = vmatprep.subr.bf16.mxu0 0
    %768 = vmatpush1.bf16.msra.mxu0 0
    %769 = vmatprep.subr.bf16.mxu0 0
    %770 = vmatpush1.bf16.msra.mxu0 0
    %771 = vmatprep.subr.bf16.mxu0 0
    %772 = vmatpush1.bf16.msra.mxu0 0
    %773 = vmatprep.subr.bf16.mxu0 0
    %774 = vmatpush1.bf16.msra.mxu0 0
    %775 = vmatprep.subr.bf16.mxu0 0
    %776 = vmatpush1.bf16.msra.mxu0 0
    %777 = vmatprep.subr.bf16.mxu0 0
    %778 = vmatpush1.bf16.msra.mxu0 0
    %779 = vmatprep.subr.bf16.mxu0 0
    %780 = vmatpush1.bf16.msra.mxu0 0
    %781 = vmatprep.mubr.bf16.mxu0 0
    %782 = vmatmul.mubr.bf16.gmra.mrb[0].mxu0 %v747
    %v783 = vpop.f32.mrb[0].mxu0
    %v784 = vadd.f32 %v732, %v783
    %v785 = vpop.f32.mrb[0].mxu0
    %v786 = vpop.f32.mrb[0].mxu0
    %v787 = vadd.f32 %v732, %v786
    %v788 = vpop.f32.mrb[0].mxu0
    %789 = vdwg.mxu0
    %v790 = vmax.f32 %v784, 0.0
    %v791 = vmax.f32 %v787, 0.0
    %v792 = vpack.c.bf16 %v791, %v790
    %v793 = vld [vmem:[%s11] sm:$0xf]
    %v794 = vld [vmem:[%s11 + $0x4] sm:$0xf]
    %v795 = vld [vmem:[%s11 + $0x8] sm:$0xf]
    %v796 = vld [vmem:[%s11 + $0xc] sm:$0xf]
    %v797 = vld [vmem:[%s12] sm:$0x1]
    %v799 = vlaneseq
    %v800 = vshrl.u32 %v799, 7
    %v801 = vsub.s32 0, %v800
    %v802 = vrot.slane %v797, %v801
    %v808 = vunpack.c.l.b16 %v793
    %v809 = vunpack.c.l.b16 %v794
    %v810 = vunpack.c.l.b16 %v795
    %v811 = vunpack.c.l.b16 %v796
    %v812 = vpack.c.b16 %v809, %v808
    %v813 = vpack.c.b16 %v811, %v810
    %v817 = vsel %vm251, %v792, 0
    %819 = vmatprep.subr.bf16.mxu0 0
    %820 = vmatpush1.bf16.msra.mxu0 %v812
    %821 = vmatprep.subr.bf16.mxu0 0
    %822 = vmatpush1.bf16.msra.mxu0 %v813
    %823 = vmatprep.subr.bf16.mxu0 0
    %824 = vmatpush1.bf16.msra.mxu0 0
    %825 = vmatprep.subr.bf16.mxu0 0
    %826 = vmatpush1.bf16.msra.mxu0 0
    %827 = vmatprep.subr.bf16.mxu0 0
    %828 = vmatpush1.bf16.msra.mxu0 0
    %829 = vmatprep.subr.bf16.mxu0 0
    %830 = vmatpush1.bf16.msra.mxu0 0
    %831 = vmatprep.subr.bf16.mxu0 0
    %832 = vmatpush1.bf16.msra.mxu0 0
    %833 = vmatprep.subr.bf16.mxu0 0
    %834 = vmatpush1.bf16.msra.mxu0 0
    %835 = vmatprep.subr.bf16.mxu0 0
    %836 = vmatpush1.bf16.msra.mxu0 0
    %837 = vmatprep.subr.bf16.mxu0 0
    %838 = vmatpush1.bf16.msra.mxu0 0
    %839 = vmatprep.subr.bf16.mxu0 0
    %840 = vmatpush1.bf16.msra.mxu0 0
    %841 = vmatprep.subr.bf16.mxu0 0
    %842 = vmatpush1.bf16.msra.mxu0 0
    %843 = vmatprep.subr.bf16.mxu0 0
    %844 = vmatpush1.bf16.msra.mxu0 0
    %845 = vmatprep.subr.bf16.mxu0 0
    %846 = vmatpush1.bf16.msra.mxu0 0
    %847 = vmatprep.subr.bf16.mxu0 0
    %848 = vmatpush1.bf16.msra.mxu0 0
    %849 = vmatprep.subr.bf16.mxu0 0
    %850 = vmatpush1.bf16.msra.mxu0 0
    %851 = vmatprep.mubr.bf16.mxu0 0
    %852 = vmatmul.mubr.bf16.gmra.mrb[0].mxu0 %v817
    %v853 = vpop.f32.mrb[0].mxu0
    %v854 = vadd.f32 %v802, %v853
    %v855 = vpop.f32.mrb[0].mxu0
    %v856 = vpop.f32.mrb[0].mxu0
    %v857 = vadd.f32 %v802, %v856
    %v858 = vpop.f32.mrb[0].mxu0
    %859 = vdwg.mxu0
    %v860 = vmax.f32 %v854, 0.0
    %v861 = vmax.f32 %v857, 0.0
    %v862 = vpack.c.bf16 %v861, %v860
    %v863 = vld [vmem:[#allocation9] sm:$0xf]
    %v864 = vld [vmem:[#allocation9 + $0x4] sm:$0xf]
    %v865 = vld [vmem:[#allocation9 + $0x8] sm:$0xf]
    %v866 = vld [vmem:[#allocation9 + $0xc] sm:$0xf]
    %v867 = vld [vmem:[%s14] sm:$0x1]
    %v869 = vlaneseq
    %v870 = vshrl.u32 %v869, 7
    %v871 = vsub.s32 0, %v870
    %v872 = vrot.slane %v867, %v871
    %v878 = vunpack.c.l.b16 %v863
    %v879 = vunpack.c.l.b16 %v864
    %v880 = vunpack.c.l.b16 %v865
    %v881 = vunpack.c.l.b16 %v866
    %v882 = vpack.c.b16 %v879, %v878
    %v883 = vpack.c.b16 %v881, %v880
    %v887 = vsel %vm251, %v862, 0
    %889 = vmatprep.subr.bf16.mxu0 0
    %890 = vmatpush1.bf16.msra.mxu0 %v882
    %891 = vmatprep.subr.bf16.mxu0 0
    %892 = vmatpush1.bf16.msra.mxu0 %v883
    %893 = vmatprep.subr.bf16.mxu0 0
    %894 = vmatpush1.bf16.msra.mxu0 0
    %895 = vmatprep.subr.bf16.mxu0 0
    %896 = vmatpush1.bf16.msra.mxu0 0
    %897 = vmatprep.subr.bf16.mxu0 0
    %898 = vmatpush1.bf16.msra.mxu0 0
    %899 = vmatprep.subr.bf16.mxu0 0
    %900 = vmatpush1.bf16.msra.mxu0 0
    %901 = vmatprep.subr.bf16.mxu0 0
    %902 = vmatpush1.bf16.msra.mxu0 0
    %903 = vmatprep.subr.bf16.mxu0 0
    %904 = vmatpush1.bf16.msra.mxu0 0
    %905 = vmatprep.subr.bf16.mxu0 0
    %906 = vmatpush1.bf16.msra.mxu0 0
    %907 = vmatprep.subr.bf16.mxu0 0
    %908 = vmatpush1.bf16.msra.mxu0 0
    %909 = vmatprep.subr.bf16.mxu0 0
    %910 = vmatpush1.bf16.msra.mxu0 0
    %911 = vmatprep.subr.bf16.mxu0 0
    %912 = vmatpush1.bf16.msra.mxu0 0
    %913 = vmatprep.subr.bf16.mxu0 0
    %914 = vmatpush1.bf16.msra.mxu0 0
    %915 = vmatprep.subr.bf16.mxu0 0
    %916 = vmatpush1.bf16.msra.mxu0 0
    %917 = vmatprep.subr.bf16.mxu0 0
    %918 = vmatpush1.bf16.msra.mxu0 0
    %919 = vmatprep.subr.bf16.mxu0 0
    %920 = vmatpush1.bf16.msra.mxu0 0
    %921 = vmatprep.mubr.bf16.mxu0 0
    %922 = vmatmul.mubr.bf16.gmra.mrb[0].mxu0 %v887
    %v923 = vpop.f32.mrb[0].mxu0
    %v924 = vadd.f32 %v872, %v923
    %v925 = vpop.f32.mrb[0].mxu0
    %v926 = vpop.f32.mrb[0].mxu0
    %v927 = vadd.f32 %v872, %v926
    %v928 = vpop.f32.mrb[0].mxu0
    %929 = vdwg.mxu0
    %930 = vst [vmem:[%s15] sm:$0xff] %v924
    %931 = vst [vmem:[%s15 + $0x8] sm:$0xff] %v927
    // Predicated region
    $region82: #{gin_forward.1} parent=1 // pred_check
      _
    $region83: #{gin_forward.1} parent=1 // pred_check_branch
      %933 = sbr.rel (0) target = $region85
    $region84: #{gin_forward.1} parent=1 // pred_region
      _
    $region85: #{gin_forward.1} parent=1 // pred_fallthru
      _
    // Predicated region
    $region86: #{gin_forward.1} parent=1 // pred_check
      _
    $region87: #{gin_forward.1} parent=1 // pred_check_branch
      %935 = sbr.rel (0) target = $region89
    $region88: #{gin_forward.1} parent=1 // pred_region
      _
    $region89: #{gin_forward.1} parent=1 // pred_fallthru
      _
    %936 = vsyncpa [#allocation3], 1
    %937 = vsyncpa [#allocation5], 1
    %938 = vsyncpa [#allocation8], 1

</llo_original>
